<compile_context>
chip_gen: v5e
topology: v5e:2x2
jax: 0.10.0
libtpu: 0.0.40
codegen_flags: <defaults>
</compile_context>

<pallas_src>
import jax
import jax.numpy as jnp
from jax.experimental import pallas as pl
from jax.experimental.pallas import tpu as pltpu


HIDDEN = 20          # fc1 output features (nn.Linear(*input_dims, 20))
OUT = 1              # fc2 output features (nn.Linear(20, 1))
LANE = 128           # TPU lane width
TB_MAX = 512         # max batch tile per grid step (keeps VMEM tiny, pipelines well)
_UNROLL_D_MAX = 64   # below this, do the D-contraction on the VPU (exact f32)


def _round_up(x, m):
    return ((x + m - 1) // m) * m


def _baseline_kernel(s_ref, a_ref, w1s_ref, w1a_ref, b1_ref, w2_ref, b2_ref, o_ref):
    # s_ref  : (D, TB)   state tile, batch on lanes
    # a_ref  : (1, TB)   action row, batch on lanes
    # w1s_ref: (H, D)    fc1 weight, state part  (torch weight[:, :D])
    # w1a_ref: (H, 1)    fc1 weight, action col  (torch weight[:, D:D+1])
    # b1_ref : (H, 1)
    # w2_ref : (H, 1)    fc2 weight column
    # b2_ref : (1, 1)    fc2 bias scalar, lives in SMEM
    # o_ref  : (1, TB)   y^T tile (lane-dense output)
    d = s_ref.shape[0]

    # Fused concat: the action column contributes w1a * action (VPU, exact f32).
    z = w1a_ref[...] * a_ref[...]                              # (H, TB)

    if d <= _UNROLL_D_MAX:
        # Tiny feature dim: contract on the VPU (static unroll), exact f32,
        # keeps the MXU (and its drain latency) off the critical path.
        for i in range(d):
            z = z + w1s_ref[:, i : i + 1] * s_ref[i : i + 1, :]
    else:
        # Larger feature dims: use the MXU.
        z = z + jnp.dot(w1s_ref[...], s_ref[...],
                        preferred_element_type=jnp.float32)

    h = jnp.tanh(z + b1_ref[...])                              # (H, TB), EUP tanh

    # fc2 (single output unit): VPU multiply + sublane reduce + SMEM scalar bias.
    y = jnp.sum(h * w2_ref[...], axis=0, keepdims=True) + b2_ref[0, 0]   # (1, TB)
    o_ref[...] = y.astype(o_ref.dtype)


def baseline_forward(state, action, params):
    """Pallas implementation of BaseLine.forward.

    state : (B, D) float
    action: (B,)   any numeric dtype (cast to float, treated as extra feature)
    params: dict with w1 (D+1, 20), b1 (20,), w2 (20, 1), b2 (1,)
    returns (B, 1) float32
    """
    state = state.astype(jnp.float32)
    B, D = state.shape

    # Parameter plumbing (tiny, once per call).
    w1 = params["w1"].astype(jnp.float32)                         # (D+1, H)
    w1s = w1[:D, :].T                                             # (H, D)
    w1a = w1[D : D + 1, :].T                                      # (H, 1)
    b1 = params["b1"].astype(jnp.float32).reshape(HIDDEN, 1)      # (H, 1)
    w2 = params["w2"].astype(jnp.float32).reshape(HIDDEN, 1)      # (H, 1)
    b2 = params["b2"].astype(jnp.float32).reshape(1, 1)           # (1, 1) -> SMEM

    # Batch tile: lane-aligned, capped so per-step VMEM stays small and the
    # "parallel" batch axis pipelines / shards across TensorCores.
    if B <= TB_MAX:
        tb = _round_up(B, LANE)
    else:
        tb = TB_MAX
    b_pad = _round_up(B, tb)

    # Layout plumbing: batch -> lane axis (features-first, batch-last).
    state_t = state.T                                             # (D, B)
    act_row = action.astype(jnp.float32).reshape(1, B)            # (1, B)
    if b_pad != B:
        state_t = jnp.pad(state_t, ((0, 0), (0, b_pad - B)))
        act_row = jnp.pad(act_row, ((0, 0), (0, b_pad - B)))

    grid = (b_pad // tb,)
    out_t = pl.pallas_call(
        _baseline_kernel,
        out_shape=jax.ShapeDtypeStruct((1, b_pad), jnp.float32),
        grid=grid,
        in_specs=[
            pl.BlockSpec((D, tb), lambda i: (0, i)),              # state_T tile
            pl.BlockSpec((1, tb), lambda i: (0, i)),              # action row tile
            pl.BlockSpec((HIDDEN, D), lambda i: (0, 0)),          # W1 (state part)
            pl.BlockSpec((HIDDEN, 1), lambda i: (0, 0)),          # W1 (action col)
            pl.BlockSpec((HIDDEN, 1), lambda i: (0, 0)),          # b1
            pl.BlockSpec((HIDDEN, 1), lambda i: (0, 0)),          # w2 column
            pl.BlockSpec(memory_space=pltpu.MemorySpace.SMEM),    # b2 scalar
        ],
        out_specs=pl.BlockSpec((1, tb), lambda i: (0, i)),        # lane-dense y^T
        compiler_params=pltpu.CompilerParams(
            dimension_semantics=("parallel",)),
    )(state_t, act_row, w1s, w1a, b1, w2, b2)

    return out_t[:, :B].T                                         # (B, 1)


def init_params(key, input_dim):
    """nn.Linear-style init (uniform +/- 1/sqrt(fan_in)); w1/w2 stored (in, out)."""
    d_in1 = input_dim + 1            # BaseLine adds 1 to input_dims[0]
    k1, k2, k3, k4 = jax.random.split(key, 4)
    bound1 = 1.0 / jnp.sqrt(d_in1)
    bound2 = 1.0 / jnp.sqrt(HIDDEN)
    return {
        "w1": jax.random.uniform(k1, (d_in1, HIDDEN), jnp.float32, -bound1, bound1),
        "b1": jax.random.uniform(k2, (HIDDEN,), jnp.float32, -bound1, bound1),
        "w2": jax.random.uniform(k3, (HIDDEN, OUT), jnp.float32, -bound2, bound2),
        "b2": jax.random.uniform(k4, (OUT,), jnp.float32, -bound2, bound2),
    }


if __name__ == "__main__":
    key = jax.random.PRNGKey(0)
    k_param, k_state, k_action = jax.random.split(key, 3)

    batch = 8
    input_dim = 7                    # input_dims = (7,)  ->  fc1 in_features = 8

    params = init_params(k_param, input_dim)
    state = jax.random.normal(k_state, (batch, input_dim), jnp.float32)
    action = jax.random.randint(k_action, (batch,), 0, 4, jnp.int32)

    out = baseline_forward(state, action, params)
    jax.block_until_ready(out)

    # Pure-JAX reference (highest precision so both sides are f32-exact).
    x_ref = jnp.concatenate([state, action.astype(jnp.float32)[:, None]], axis=1)
    h_ref = jnp.tanh(
        jnp.dot(x_ref, params["w1"], precision=jax.lax.Precision.HIGHEST)
        + params["b1"]
    )
    y_ref = (
        jnp.dot(h_ref, params["w2"], precision=jax.lax.Precision.HIGHEST)
        + params["b2"].reshape(1, OUT)
    )
    assert out.shape == (batch, 1)
    assert jnp.allclose(out, y_ref, atol=1e-5, rtol=1e-5)

    print("KERNEL_OK")
</pallas_src>

<mosaic_0001>
module attributes {stable_mosaic.version = 11 : i64} {
  func.func @_baseline_kernel(%arg0: i32, %arg1: memref<7x128xf32, #tpu.memory_space<vmem>>, %arg2: memref<1x128xf32, #tpu.memory_space<vmem>>, %arg3: memref<20x7xf32, #tpu.memory_space<vmem>>, %arg4: memref<20x1xf32, #tpu.memory_space<vmem>>, %arg5: memref<20x1xf32, #tpu.memory_space<vmem>>, %arg6: memref<20x1xf32, #tpu.memory_space<vmem>>, %arg7: memref<1x1xf32, #tpu.memory_space<smem>>, %arg8: memref<1x128xf32, #tpu.memory_space<vmem>>) attributes {dimension_semantics = [#tpu.dimension_semantics<parallel>], iteration_bounds = array<i64: 1>, scalar_prefetch = 0 : i64, scratch_operands = 0 : i64, tpu.core_type = #tpu.core_type<tc>, window_params = [{transform_indices = @transform_0, window_bounds = array<i64: 7, 128>}, {transform_indices = @transform_1, window_bounds = array<i64: 1, 128>}, {pipeline_mode = #tpu.pipeline_mode<synchronous>, transform_indices = @transform_2, window_bounds = array<i64: 20, 7>}, {pipeline_mode = #tpu.pipeline_mode<synchronous>, transform_indices = @transform_3, window_bounds = array<i64: 20, 1>}, {pipeline_mode = #tpu.pipeline_mode<synchronous>, transform_indices = @transform_4, window_bounds = array<i64: 20, 1>}, {pipeline_mode = #tpu.pipeline_mode<synchronous>, transform_indices = @transform_5, window_bounds = array<i64: 20, 1>}, {transform_indices = @transform_6, window_bounds = array<i64: 1, 1>}, {transform_indices = @transform_7, window_bounds = array<i64: 1, 128>}]} {
    %c0 = arith.constant 0 : index
    %c0_0 = arith.constant 0 : index
    %0 = vector.load %arg4[%c0, %c0_0] : memref<20x1xf32, #tpu.memory_space<vmem>>, vector<20x1xf32>
    %c0_1 = arith.constant 0 : index
    %c0_2 = arith.constant 0 : index
    %1 = vector.load %arg2[%c0_1, %c0_2] : memref<1x128xf32, #tpu.memory_space<vmem>>, vector<1x128xf32>
    %2 = vector.broadcast %0 : vector<20x1xf32> to vector<20x128xf32>
    %3 = vector.broadcast %1 : vector<1x128xf32> to vector<20x128xf32>
    %4 = arith.mulf %2, %3 : vector<20x128xf32>
    %c0_3 = arith.constant 0 : index
    %c0_4 = arith.constant 0 : index
    %5 = vector.load %arg3[%c0_3, %c0_4] : memref<20x7xf32, #tpu.memory_space<vmem>>, vector<20x1xf32>
    %c0_5 = arith.constant 0 : index
    %c0_6 = arith.constant 0 : index
    %6 = vector.load %arg1[%c0_5, %c0_6] : memref<7x128xf32, #tpu.memory_space<vmem>>, vector<1x128xf32>
    %7 = vector.broadcast %5 : vector<20x1xf32> to vector<20x128xf32>
    %8 = vector.broadcast %6 : vector<1x128xf32> to vector<20x128xf32>
    %9 = arith.mulf %7, %8 : vector<20x128xf32>
    %10 = arith.addf %4, %9 : vector<20x128xf32>
    %c0_7 = arith.constant 0 : index
    %c1 = arith.constant 1 : index
    %11 = vector.load %arg3[%c0_7, %c1] : memref<20x7xf32, #tpu.memory_space<vmem>>, vector<20x1xf32>
    %c1_8 = arith.constant 1 : index
    %c0_9 = arith.constant 0 : index
    %12 = vector.load %arg1[%c1_8, %c0_9] : memref<7x128xf32, #tpu.memory_space<vmem>>, vector<1x128xf32>
    %13 = vector.broadcast %11 : vector<20x1xf32> to vector<20x128xf32>
    %14 = vector.broadcast %12 : vector<1x128xf32> to vector<20x128xf32>
    %15 = arith.mulf %13, %14 : vector<20x128xf32>
    %16 = arith.addf %10, %15 : vector<20x128xf32>
    %c0_10 = arith.constant 0 : index
    %c2 = arith.constant 2 : index
    %17 = vector.load %arg3[%c0_10, %c2] : memref<20x7xf32, #tpu.memory_space<vmem>>, vector<20x1xf32>
    %c2_11 = arith.constant 2 : index
    %c0_12 = arith.constant 0 : index
    %18 = vector.load %arg1[%c2_11, %c0_12] : memref<7x128xf32, #tpu.memory_space<vmem>>, vector<1x128xf32>
    %19 = vector.broadcast %17 : vector<20x1xf32> to vector<20x128xf32>
    %20 = vector.broadcast %18 : vector<1x128xf32> to vector<20x128xf32>
    %21 = arith.mulf %19, %20 : vector<20x128xf32>
    %22 = arith.addf %16, %21 : vector<20x128xf32>
    %c0_13 = arith.constant 0 : index
    %c3 = arith.constant 3 : index
    %23 = vector.load %arg3[%c0_13, %c3] : memref<20x7xf32, #tpu.memory_space<vmem>>, vector<20x1xf32>
    %c3_14 = arith.constant 3 : index
    %c0_15 = arith.constant 0 : index
    %24 = vector.load %arg1[%c3_14, %c0_15] : memref<7x128xf32, #tpu.memory_space<vmem>>, vector<1x128xf32>
    %25 = vector.broadcast %23 : vector<20x1xf32> to vector<20x128xf32>
    %26 = vector.broadcast %24 : vector<1x128xf32> to vector<20x128xf32>
    %27 = arith.mulf %25, %26 : vector<20x128xf32>
    %28 = arith.addf %22, %27 : vector<20x128xf32>
    %c0_16 = arith.constant 0 : index
    %c4 = arith.constant 4 : index
    %29 = vector.load %arg3[%c0_16, %c4] : memref<20x7xf32, #tpu.memory_space<vmem>>, vector<20x1xf32>
    %c4_17 = arith.constant 4 : index
    %c0_18 = arith.constant 0 : index
    %30 = vector.load %arg1[%c4_17, %c0_18] : memref<7x128xf32, #tpu.memory_space<vmem>>, vector<1x128xf32>
    %31 = vector.broadcast %29 : vector<20x1xf32> to vector<20x128xf32>
    %32 = vector.broadcast %30 : vector<1x128xf32> to vector<20x128xf32>
    %33 = arith.mulf %31, %32 : vector<20x128xf32>
    %34 = arith.addf %28, %33 : vector<20x128xf32>
    %c0_19 = arith.constant 0 : index
    %c5 = arith.constant 5 : index
    %35 = vector.load %arg3[%c0_19, %c5] : memref<20x7xf32, #tpu.memory_space<vmem>>, vector<20x1xf32>
    %c5_20 = arith.constant 5 : index
    %c0_21 = arith.constant 0 : index
    %36 = vector.load %arg1[%c5_20, %c0_21] : memref<7x128xf32, #tpu.memory_space<vmem>>, vector<1x128xf32>
    %37 = vector.broadcast %35 : vector<20x1xf32> to vector<20x128xf32>
    %38 = vector.broadcast %36 : vector<1x128xf32> to vector<20x128xf32>
    %39 = arith.mulf %37, %38 : vector<20x128xf32>
    %40 = arith.addf %34, %39 : vector<20x128xf32>
    %c0_22 = arith.constant 0 : index
    %c6 = arith.constant 6 : index
    %41 = vector.load %arg3[%c0_22, %c6] : memref<20x7xf32, #tpu.memory_space<vmem>>, vector<20x1xf32>
    %c6_23 = arith.constant 6 : index
    %c0_24 = arith.constant 0 : index
    %42 = vector.load %arg1[%c6_23, %c0_24] : memref<7x128xf32, #tpu.memory_space<vmem>>, vector<1x128xf32>
    %43 = vector.broadcast %41 : vector<20x1xf32> to vector<20x128xf32>
    %44 = vector.broadcast %42 : vector<1x128xf32> to vector<20x128xf32>
    %45 = arith.mulf %43, %44 : vector<20x128xf32>
    %46 = arith.addf %40, %45 : vector<20x128xf32>
    %c0_25 = arith.constant 0 : index
    %c0_26 = arith.constant 0 : index
    %47 = vector.load %arg5[%c0_25, %c0_26] : memref<20x1xf32, #tpu.memory_space<vmem>>, vector<20x1xf32>
    %48 = vector.broadcast %47 : vector<20x1xf32> to vector<20x128xf32>
    %49 = arith.addf %46, %48 : vector<20x128xf32>
    %50 = math.tanh %49 : vector<20x128xf32>
    %c0_27 = arith.constant 0 : index
    %c0_28 = arith.constant 0 : index
    %51 = vector.load %arg6[%c0_27, %c0_28] : memref<20x1xf32, #tpu.memory_space<vmem>>, vector<20x1xf32>
    %52 = vector.broadcast %51 : vector<20x1xf32> to vector<20x128xf32>
    %53 = arith.mulf %50, %52 : vector<20x128xf32>
    %cst = arith.constant dense<0.000000e+00> : vector<128xf32>
    %54 = vector.multi_reduction <add>, %53, %cst [0] : vector<20x128xf32> to vector<128xf32>
    %55 = vector.shape_cast %54 : vector<128xf32> to vector<1x128xf32>
    %c0_29 = arith.constant 0 : index
    %c0_30 = arith.constant 0 : index
    %56 = memref.load %arg7[%c0_29, %c0_30] : memref<1x1xf32, #tpu.memory_space<smem>>
    %57 = vector.broadcast %56 : f32 to vector<1x128xf32>
    %58 = arith.addf %55, %57 : vector<1x128xf32>
    %c0_31 = arith.constant 0 : index
    %c0_32 = arith.constant 0 : index
    %59 = vector.load %arg8[%c0_31, %c0_32] : memref<1x128xf32, #tpu.memory_space<vmem>>, vector<1x128xf32>
    tpu.vector_store %arg8[%c0_31, %c0_32], %58 {strides = array<i32>} : memref<1x128xf32, #tpu.memory_space<vmem>>, vector<1x128xf32>,
    return
  }
  func.func @transform_0(%arg0: i32) -> (i32, i32) {
    %c0_i32 = arith.constant 0 : i32
    %c0_i32_0 = arith.constant 0 : i32
    return %c0_i32, %arg0 : i32, i32
  }
  func.func @transform_1(%arg0: i32) -> (i32, i32) {
    %c0_i32 = arith.constant 0 : i32
    %c0_i32_0 = arith.constant 0 : i32
    return %c0_i32, %arg0 : i32, i32
  }
  func.func @transform_2(%arg0: i32) -> (i32, i32) {
    %c0_i32 = arith.constant 0 : i32
    %c0_i32_0 = arith.constant 0 : i32
    %c0_i32_1 = arith.constant 0 : i32
    return %c0_i32, %c0_i32_0 : i32, i32
  }
  func.func @transform_3(%arg0: i32) -> (i32, i32) {
    %c0_i32 = arith.constant 0 : i32
    %c0_i32_0 = arith.constant 0 : i32
    %c0_i32_1 = arith.constant 0 : i32
    return %c0_i32, %c0_i32_0 : i32, i32
  }
  func.func @transform_4(%arg0: i32) -> (i32, i32) {
    %c0_i32 = arith.constant 0 : i32
    %c0_i32_0 = arith.constant 0 : i32
    %c0_i32_1 = arith.constant 0 : i32
    return %c0_i32, %c0_i32_0 : i32, i32
  }
  func.func @transform_5(%arg0: i32) -> (i32, i32) {
    %c0_i32 = arith.constant 0 : i32
    %c0_i32_0 = arith.constant 0 : i32
    %c0_i32_1 = arith.constant 0 : i32
    return %c0_i32, %c0_i32_0 : i32, i32
  }
  func.func @transform_6(%arg0: i32) -> (i32, i32) {
    %c0_i32 = arith.constant 0 : i32
    %c0_i32_0 = arith.constant 0 : i32
    %c0_i32_1 = arith.constant 0 : i32
    return %c0_i32, %c0_i32_0 : i32, i32
  }
  func.func @transform_7(%arg0: i32) -> (i32, i32) {
    %c0_i32 = arith.constant 0 : i32
    %c0_i32_0 = arith.constant 0 : i32
    return %c0_i32, %arg0 : i32, i32
  }
}

</mosaic_0001>

<llo_original>
// kernel: tpu_custom_call.1
$region0: #{tpu_custom_call.1}
  #allocation0 [shape = 'u32[]', space=smem, size = 0x4, offset = 0x4, fixed_abs, tag = 'smem constant byte address 0x4 - core index']
  #allocation1 [shape = 'u32[72,128]{1,0:T(1,128)}', space=vmem, size = 0x9000, scoped, tag = 'internal scratch']
  #allocation2 [shape = 'f32[1,1]{1,0:T(1,128)S(6)}', space=smem, size = 0x200, scoped, tag = 'scoped memory for tpu_custom_call.1']
  %s0 = inlined_call_operand.vmem [shape: f32[7,128], index: 0, kind: input, shape index: {}]
  %s1 = inlined_call_operand.vmem [shape: f32[1,128], index: 1, kind: input, shape index: {}]
  %s2 = inlined_call_operand.vmem [shape: f32[20,7], index: 2, kind: input, shape index: {}]
  %s3 = inlined_call_operand.vmem [shape: f32[20,1], index: 3, kind: input, shape index: {}]
  %s4 = inlined_call_operand.vmem [shape: f32[20,1], index: 4, kind: input, shape index: {}]
  %s5 = inlined_call_operand.vmem [shape: f32[20,1], index: 5, kind: input, shape index: {}]
  %s6 = inlined_call_operand.<no memory space> [shape: f32[1,1], index: 6, kind: input, shape index: {}]
  %s7 = inlined_call_operand.hbm [shape: f32[1,128], index: 7, kind: output, shape index: {}]
  %s8 = sld [smem:[#allocation0]]
  $region38: #{tpu_custom_call.1} parent=0
    _
  %s10 = ssub.s32 1, %s8
  %s11 = scalar_select 0, %s10, %s8
  %12 = sst [smem:[#allocation2]] %s6
  $region1: #{tpu_custom_call.1} parent=0
    #allocation3 [shape = 'u8[512]{0}', space=vmem, size = 0x400, scoped, tag = 'output window, operand 0, single buffered']
    #allocation4 [shape = 's32[1]{0}', space=sflag, size = 0x4, scoped, tag = 'scoped memory for tpu_custom_call.1']
    %13 = vsyncpa [#allocation4], 0
    // Predicated region
    $region2: #{tpu_custom_call.1} parent=1 // pred_check
      _
    $region3: #{tpu_custom_call.1} parent=1 // pred_check_branch
      %15 = sbr.rel (0) target = $region5
    $region4: #{tpu_custom_call.1} parent=1 // pred_region
      _
    $region5: #{tpu_custom_call.1} parent=1 // pred_fallthru
      _
    // Predicated region
    $region6: #{tpu_custom_call.1} parent=1 // pred_check
      _
    $region7: #{tpu_custom_call.1} parent=1 // pred_check_branch
      %17 = sbr.rel (0) target = $region9
    $region8: #{tpu_custom_call.1} parent=1 // pred_region
      _
    $region9: #{tpu_custom_call.1} parent=1 // pred_fallthru
      _
    // Predicated region
    $region10: #{tpu_custom_call.1} parent=1 // pred_check
      _
    $region11: #{tpu_custom_call.1} parent=1 // pred_check_branch
      %19 = sbr.rel (0) target = $region13
    $region12: #{tpu_custom_call.1} parent=1 // pred_region
      _
    $region13: #{tpu_custom_call.1} parent=1 // pred_fallthru
      _
    // Predicated region
    $region14: #{tpu_custom_call.1} parent=1 // pred_check
      _
    $region15: #{tpu_custom_call.1} parent=1 // pred_check_branch
      %21 = sbr.rel (0) target = $region17
    $region16: #{tpu_custom_call.1} parent=1 // pred_region
      _
    $region17: #{tpu_custom_call.1} parent=1 // pred_fallthru
      _
    // Predicated region
    $region18: #{tpu_custom_call.1} parent=1 // pred_check
      _
    $region19: #{tpu_custom_call.1} parent=1 // pred_check_branch
      %23 = sbr.rel (0) target = $region21
    $region20: #{tpu_custom_call.1} parent=1 // pred_region
      _
    $region21: #{tpu_custom_call.1} parent=1 // pred_fallthru
      _
    // Predicated region
    $region22: #{tpu_custom_call.1} parent=1 // pred_check
      _
    $region23: #{tpu_custom_call.1} parent=1 // pred_check_branch
      %25 = sbr.rel (0) target = $region25
    $region24: #{tpu_custom_call.1} parent=1 // pred_region
      _
    $region25: #{tpu_custom_call.1} parent=1 // pred_fallthru
      _
    // Predicated region
    $region26: #{tpu_custom_call.1} parent=1 // pred_check
      _
    $region27: #{tpu_custom_call.1} parent=1 // pred_check_branch
      %27 = sbr.rel (0) target = $region29
    $region28: #{tpu_custom_call.1} parent=1 // pred_region
      _
    $region29: #{tpu_custom_call.1} parent=1 // pred_fallthru
      _
    %v28 = vld [vmem:[%s3] sm:$0xff]
    %v29 = vld [vmem:[%s3 + $0x8] sm:$0xff]
    %v30 = vld [vmem:[%s3 + $0x10] sm:$0xf]
    %v31 = vld [vmem:[%s1] sm:$0x1]
    %33 = vset.pattern.permute.xlu0 0
    %34 = vperm.xlu0 %33, %v28
    %v35 = vpop.permute.xlu0 %34
    %38 = vset.pattern.permute.xlu0 0
    %39 = vperm.xlu0 %38, %v29
    %v40 = vpop.permute.xlu0 %39
    %43 = vset.pattern.permute.xlu0 0
    %44 = vperm.xlu0 %43, %v30
    %v45 = vpop.permute.xlu0 %44
    %v48 = vperm.slane %v31, 0
    %v50 = vmul.f32 %v35, %v48
    %v51 = vmul.f32 %v40, %v48
    %v52 = vmul.f32 %v45, %v48
    %v53 = vld [vmem:[%s2] sm:$0xff]
    %v54 = vld [vmem:[%s2 + $0x8] sm:$0xff]
    %v55 = vld [vmem:[%s2 + $0x10] sm:$0xf]
    %v56 = vld [vmem:[%s0] sm:$0x1]
    %58 = vset.pattern.permute.xlu0 0
    %59 = vperm.xlu0 %58, %v53
    %v60 = vpop.permute.xlu0 %59
    %63 = vset.pattern.permute.xlu0 0
    %64 = vperm.xlu0 %63, %v54
    %v65 = vpop.permute.xlu0 %64
    %68 = vset.pattern.permute.xlu0 0
    %69 = vperm.xlu0 %68, %v55
    %v70 = vpop.permute.xlu0 %69
    %v72 = vperm.slane %v56, 0
    %v73 = vmul.f32 %v60, %v72
    %v74 = vmul.f32 %v65, %v72
    %v75 = vmul.f32 %v70, %v72
    %v76 = vadd.f32 %v50, %v73
    %v77 = vadd.f32 %v51, %v74
    %v78 = vadd.f32 %v52, %v75
    %v79 = vld [vmem:[%s0 + $0x1] sm:$0x1]
    %80 = vset.pattern.permute.xlu0 1
    %81 = vperm.xlu0 %80, %v53
    %v82 = vpop.permute.xlu0 %81
    %84 = vset.pattern.permute.xlu0 1
    %85 = vperm.xlu0 %84, %v54
    %v86 = vpop.permute.xlu0 %85
    %88 = vset.pattern.permute.xlu0 1
    %89 = vperm.xlu0 %88, %v55
    %v90 = vpop.permute.xlu0 %89
    %v92 = vperm.slane %v79, 0
    %v93 = vmul.f32 %v82, %v92
    %v94 = vmul.f32 %v86, %v92
    %v95 = vmul.f32 %v90, %v92
    %v96 = vadd.f32 %v76, %v93
    %v97 = vadd.f32 %v77, %v94
    %v98 = vadd.f32 %v78, %v95
    %v99 = vld [vmem:[%s0 + $0x2] sm:$0x1]
    %100 = vset.pattern.permute.xlu0 2
    %101 = vperm.xlu0 %100, %v53
    %v102 = vpop.permute.xlu0 %101
    %104 = vset.pattern.permute.xlu0 2
    %105 = vperm.xlu0 %104, %v54
    %v106 = vpop.permute.xlu0 %105
    %108 = vset.pattern.permute.xlu0 2
    %109 = vperm.xlu0 %108, %v55
    %v110 = vpop.permute.xlu0 %109
    %v112 = vperm.slane %v99, 0
    %v113 = vmul.f32 %v102, %v112
    %v114 = vmul.f32 %v106, %v112
    %v115 = vmul.f32 %v110, %v112
    %v116 = vadd.f32 %v96, %v113
    %v117 = vadd.f32 %v97, %v114
    %v118 = vadd.f32 %v98, %v115
    %v119 = vld [vmem:[%s0 + $0x3] sm:$0x1]
    %120 = vset.pattern.permute.xlu0 3
    %121 = vperm.xlu0 %120, %v53
    %v122 = vpop.permute.xlu0 %121
    %124 = vset.pattern.permute.xlu0 3
    %125 = vperm.xlu0 %124, %v54
    %v126 = vpop.permute.xlu0 %125
    %128 = vset.pattern.permute.xlu0 3
    %129 = vperm.xlu0 %128, %v55
    %v130 = vpop.permute.xlu0 %129
    %v132 = vperm.slane %v119, 0
    %v133 = vmul.f32 %v122, %v132
    %v134 = vmul.f32 %v126, %v132
    %v135 = vmul.f32 %v130, %v132
    %v136 = vadd.f32 %v116, %v133
    %v137 = vadd.f32 %v117, %v134
    %v138 = vadd.f32 %v118, %v135
    %v139 = vld [vmem:[%s0 + $0x4] sm:$0x1]
    %140 = vset.pattern.permute.xlu0 4
    %141 = vperm.xlu0 %140, %v53
    %v142 = vpop.permute.xlu0 %141
    %144 = vset.pattern.permute.xlu0 4
    %145 = vperm.xlu0 %144, %v54
    %v146 = vpop.permute.xlu0 %145
    %148 = vset.pattern.permute.xlu0 4
    %149 = vperm.xlu0 %148, %v55
    %v150 = vpop.permute.xlu0 %149
    %v152 = vperm.slane %v139, 0
    %v153 = vmul.f32 %v142, %v152
    %v154 = vmul.f32 %v146, %v152
    %v155 = vmul.f32 %v150, %v152
    %v156 = vadd.f32 %v136, %v153
    %v157 = vadd.f32 %v137, %v154
    %v158 = vadd.f32 %v138, %v155
    %v159 = vld [vmem:[%s0 + $0x5] sm:$0x1]
    %160 = vset.pattern.permute.xlu0 5
    %161 = vperm.xlu0 %160, %v53
    %v162 = vpop.permute.xlu0 %161
    %164 = vset.pattern.permute.xlu0 5
    %165 = vperm.xlu0 %164, %v54
    %v166 = vpop.permute.xlu0 %165
    %168 = vset.pattern.permute.xlu0 5
    %169 = vperm.xlu0 %168, %v55
    %v170 = vpop.permute.xlu0 %169
    %v172 = vperm.slane %v159, 0
    %v173 = vmul.f32 %v162, %v172
    %v174 = vmul.f32 %v166, %v172
    %v175 = vmul.f32 %v170, %v172
    %v176 = vadd.f32 %v156, %v173
    %v177 = vadd.f32 %v157, %v174
    %v178 = vadd.f32 %v158, %v175
    %v179 = vld [vmem:[%s0 + $0x6] sm:$0x1]
    %180 = vset.pattern.permute.xlu0 6
    %181 = vperm.xlu0 %180, %v53
    %v182 = vpop.permute.xlu0 %181
    %184 = vset.pattern.permute.xlu0 6
    %185 = vperm.xlu0 %184, %v54
    %v186 = vpop.permute.xlu0 %185
    %188 = vset.pattern.permute.xlu0 6
    %189 = vperm.xlu0 %188, %v55
    %v190 = vpop.permute.xlu0 %189
    %v192 = vperm.slane %v179, 0
    %v193 = vmul.f32 %v182, %v192
    %v194 = vmul.f32 %v186, %v192
    %v195 = vmul.f32 %v190, %v192
    %v196 = vadd.f32 %v176, %v193
    %v197 = vadd.f32 %v177, %v194
    %v198 = vadd.f32 %v178, %v195
    %v199 = vld [vmem:[%s4] sm:$0xff]
    %v200 = vld [vmem:[%s4 + $0x8] sm:$0xff]
    %v201 = vld [vmem:[%s4 + $0x10] sm:$0xf]
    %203 = vset.pattern.permute.xlu0 0
    %204 = vperm.xlu0 %203, %v199
    %v205 = vpop.permute.xlu0 %204
    %208 = vset.pattern.permute.xlu0 0
    %209 = vperm.xlu0 %208, %v200
    %v210 = vpop.permute.xlu0 %209
    %213 = vset.pattern.permute.xlu0 0
    %214 = vperm.xlu0 %213, %v201
    %v215 = vpop.permute.xlu0 %214
    %v217 = vadd.f32 %v196, %v205
    %v218 = vadd.f32 %v197, %v210
    %v219 = vadd.f32 %v198, %v215
    %v220 = vtanh.pop %v217
    %v221 = vtanh.pop %v218
    %v222 = vtanh.pop %v219
    %v223 = vld [vmem:[%s5] sm:$0xff]
    %v224 = vld [vmem:[%s5 + $0x8] sm:$0xff]
    %v225 = vld [vmem:[%s5 + $0x10] sm:$0xf]
    %227 = vset.pattern.permute.xlu0 0
    %228 = vperm.xlu0 %227, %v223
    %v229 = vpop.permute.xlu0 %228
    %232 = vset.pattern.permute.xlu0 0
    %233 = vperm.xlu0 %232, %v224
    %v234 = vpop.permute.xlu0 %233
    %237 = vset.pattern.permute.xlu0 0
    %238 = vperm.xlu0 %237, %v225
    %v239 = vpop.permute.xlu0 %238
    %v241 = vmul.f32 %v220, %v229
    %v242 = vmul.f32 %v221, %v234
    %v243 = vmul.f32 %v222, %v239
    %v244 = vadd.f32 %v241, %v242
    %vm245 = vcmask 1043456
    %v246 = vsel %vm245, %v243, 0.0
    %v247 = vadd.f32 %v244, %v246
    %v248 = vrot.slane %v247, 4
    %v249 = vadd.f32 %v247, %v248
    %v250 = vrot.slane %v249, 2
    %v251 = vadd.f32 %v249, %v250
    %v252 = vrot.slane %v251, 1
    %v253 = vadd.f32 %v251, %v252
    %s254 = sld [smem:[#allocation2]]
    %v255 = vstv %s254
    %v256 = vadd.f32 %v253, %v255
    %257 = vst [vmem:[#allocation3] sm:$0x1] %v256
    // Predicated region
    $region30: #{tpu_custom_call.1} parent=1 // pred_check
      _
    $region31: #{tpu_custom_call.1} parent=1 // pred_check_branch
      %259 = sbr.rel (0) target = $region33
    $region32: #{tpu_custom_call.1} parent=1 // pred_region
      %261 = vsyncadd [#allocation4], 0
      %s263 = sshll.u32 [#allocation3], 4
      %s264 = int_to_ptr.vmem [resolvable:$true] %s263
      %s265 = sshll.u32 %s7, 4
      %s266 = int_to_ptr.hbm [resolvable:$true] %s265
      %268 = dma.vmem_to_hbm [thread:$0]  %s264, 16, %s266, [#allocation4]
    $region33: #{tpu_custom_call.1} parent=1 // pred_fallthru
      _
    // Predicated region
    $region34: #{tpu_custom_call.1} parent=1 // pred_check
      _
    $region35: #{tpu_custom_call.1} parent=1 // pred_check_branch
      %270 = sbr.rel (0) target = $region37
    $region36: #{tpu_custom_call.1} parent=1 // pred_region
      %272 = dma.done [#allocation4], 16
    $region37: #{tpu_custom_call.1} parent=1 // pred_fallthru
      _
    %273 = vsyncpa [#allocation4], 1

</llo_original>
